<compile_context>
chip_gen: v7x
topology: tpu7x:2x2x1
jax: 0.10.0
libtpu: 0.0.40
codegen_flags: <defaults>
</compile_context>

<pallas_src>
import functools

import jax
import jax.numpy as jnp
from jax.experimental import pallas as pl
from jax.experimental.pallas import tpu as pltpu

IN_FEATURES = 784
OUT_FEATURES = 10


def _round_up(x, m):
    return ((x + m - 1) // m) * m


def _choose_tb(batch, block_b):
    # Multiple of 16 (sublane-packed for any dtype); at least 2 grid steps
    # when the batch allows (keeps both v7x TensorCores streaming); capped by
    # block_b and by the (rounded-up) batch itself.
    tb = min(block_b, _round_up(pl.cdiv(batch, 2), 16))
    tb = min(tb, _round_up(batch, 16))
    return max(tb, 16)


def prepare_mnist_logistic_params(weight, bias):
    """One-time (model-load) prep, hoisted out of the forward pass.

    weight: torch-layout (10, 784)  ->  K-major (784, 10) f32
    bias:   (10,)                   ->  (1, 10) f32
    """
    w_t = jnp.asarray(weight, jnp.float32).T          # (784, 10)
    b2 = jnp.asarray(bias, jnp.float32).reshape(1, -1)  # (1, 10)
    return w_t, b2


def _linear_kernel(x_ref, w_ref, b_ref, o_ref):
    # x_ref: (tb, 784) f32 batch tile
    # w_ref: (784, 10) f32 pre-transposed weight, resident in VMEM
    # b_ref: (1, 10)   f32 bias, resident in VMEM
    # o_ref: (tb, 10)  output tile (masked store on the edge block)
    acc = jnp.dot(x_ref[...], w_ref[...], preferred_element_type=jnp.float32)
    o_ref[...] = (acc + b_ref[...]).astype(o_ref.dtype)


@functools.partial(jax.jit, static_argnames=("block_b",))
def mnist_logistic_forward(x, w_t, b2, *, block_b=1024):
    """x: (B, 784), w_t: (784, 10), b2: (1, 10)  ->  (B, 10) logits."""
    B, K = x.shape
    N = w_t.shape[1]

    tb = _choose_tb(B, block_b)
    grid = (pl.cdiv(B, tb),)  # last block is a partial (masked) edge block

    return pl.pallas_call(
        _linear_kernel,
        out_shape=jax.ShapeDtypeStruct((B, N), x.dtype),
        grid_spec=pltpu.PrefetchScalarGridSpec(
            num_scalar_prefetch=0,
            grid=grid,
            in_specs=[
                pl.BlockSpec((tb, K), lambda i: (i, 0)),   # x: batch tile (pipelined)
                pl.BlockSpec((K, N), lambda i: (0, 0)),    # weight: resident, DMA'd once
                pl.BlockSpec((1, N), lambda i: (0, 0)),    # bias: resident, DMA'd once
            ],
            out_specs=pl.BlockSpec((tb, N), lambda i: (i, 0)),
        ),
        compiler_params=pltpu.CompilerParams(
            # Batch tiles are independent -> shard grid across TensorCores.
            dimension_semantics=("parallel",),
        ),
    )(x, w_t, b2)


def _ref_forward(x, weight, bias):
    # Pure-JAX reference matching torch.nn.Linear semantics (f32).
    return x @ weight.T + bias


if __name__ == "__main__":
    key = jax.random.PRNGKey(0)
    kx, kw, kb = jax.random.split(key, 3)

    B, IN, OUT = 200, IN_FEATURES, OUT_FEATURES  # B deliberately not a tile multiple
    bound = 1.0 / (IN ** 0.5)  # torch nn.Linear-style uniform init bound
    weight = jax.random.uniform(kw, (OUT, IN), jnp.float32, -bound, bound)
    bias = jax.random.uniform(kb, (OUT,), jnp.float32, -bound, bound)
    x = jax.random.normal(kx, (B, IN), jnp.float32)

    # Hoisted, one-time parameter prep (outside the jitted forward).
    w_t, b2 = prepare_mnist_logistic_params(weight, bias)

    out = mnist_logistic_forward(x, w_t, b2)
    out = jax.block_until_ready(out)
    assert out.shape == (B, OUT), out.shape

    ref = _ref_forward(x, weight, bias)
    assert jnp.allclose(out, ref, atol=1e-3, rtol=1e-3), "mismatch vs f32 reference"

    print("KERNEL_OK")
</pallas_src>

<mosaic_0001>
module attributes {stable_mosaic.version = 11 : i64} {
  func.func @_linear_kernel(%arg0: i32, %arg1: memref<112x784xf32, #tpu.memory_space<vmem>>, %arg2: memref<784x10xf32, #tpu.memory_space<vmem>>, %arg3: memref<1x10xf32, #tpu.memory_space<vmem>>, %arg4: memref<112x10xf32, #tpu.memory_space<vmem>>) attributes {dimension_semantics = [#tpu.dimension_semantics<parallel>], iteration_bounds = array<i64: 2>, scalar_prefetch = 0 : i64, scratch_operands = 0 : i64, tpu.core_type = #tpu.core_type<tc>, window_params = [{transform_indices = @transform_0, window_bounds = array<i64: 112, 784>}, {pipeline_mode = #tpu.pipeline_mode<synchronous>, transform_indices = @transform_1, window_bounds = array<i64: 784, 10>}, {pipeline_mode = #tpu.pipeline_mode<synchronous>, transform_indices = @transform_2, window_bounds = array<i64: 1, 10>}, {transform_indices = @transform_3, window_bounds = array<i64: 112, 10>}]} {
    %c0 = arith.constant 0 : index
    %c0_0 = arith.constant 0 : index
    %0 = vector.load %arg1[%c0, %c0_0] : memref<112x784xf32, #tpu.memory_space<vmem>>, vector<112x784xf32>
    %c0_1 = arith.constant 0 : index
    %c0_2 = arith.constant 0 : index
    %1 = vector.load %arg2[%c0_1, %c0_2] : memref<784x10xf32, #tpu.memory_space<vmem>>, vector<784x10xf32>
    %cst = arith.constant dense<0.000000e+00> : vector<112x10xf32>
    %2 = tpu.matmul %0, %1, %cst {dimension_numbers = #tpu.dot_dimension_numbers<[1], [0], [0], [1], [0, 0, 1, 1], [], []>} : vector<112x784xf32>, vector<784x10xf32>, vector<112x10xf32> -> vector<112x10xf32>
    %c0_3 = arith.constant 0 : index
    %c0_4 = arith.constant 0 : index
    %3 = vector.load %arg3[%c0_3, %c0_4] : memref<1x10xf32, #tpu.memory_space<vmem>>, vector<1x10xf32>
    %4 = vector.broadcast %3 : vector<1x10xf32> to vector<112x10xf32>
    %5 = arith.addf %2, %4 : vector<112x10xf32>
    %c0_5 = arith.constant 0 : index
    %c0_6 = arith.constant 0 : index
    %6 = vector.load %arg4[%c0_5, %c0_6] : memref<112x10xf32, #tpu.memory_space<vmem>>, vector<112x10xf32>
    tpu.vector_store %arg4[%c0_5, %c0_6], %5 {strides = array<i32>} : memref<112x10xf32, #tpu.memory_space<vmem>>, vector<112x10xf32>,
    return
  }
  func.func @transform_0(%arg0: i32) -> (i32, i32) {
    %c0_i32 = arith.constant 0 : i32
    %c0_i32_0 = arith.constant 0 : i32
    return %arg0, %c0_i32 : i32, i32
  }
  func.func @transform_1(%arg0: i32) -> (i32, i32) {
    %c0_i32 = arith.constant 0 : i32
    %c0_i32_0 = arith.constant 0 : i32
    %c0_i32_1 = arith.constant 0 : i32
    return %c0_i32, %c0_i32_0 : i32, i32
  }
  func.func @transform_2(%arg0: i32) -> (i32, i32) {
    %c0_i32 = arith.constant 0 : i32
    %c0_i32_0 = arith.constant 0 : i32
    %c0_i32_1 = arith.constant 0 : i32
    return %c0_i32, %c0_i32_0 : i32, i32
  }
  func.func @transform_3(%arg0: i32) -> (i32, i32) {
    %c0_i32 = arith.constant 0 : i32
    %c0_i32_0 = arith.constant 0 : i32
    return %arg0, %c0_i32 : i32, i32
  }
}

</mosaic_0001>

<llo_original>
// kernel: mnist_logistic_forward.1
$region0: #{mnist_logistic_forward.1}
  #allocation0 [shape = 'u32[]', space=smem, size = 0x4, offset = 0x4, fixed_abs, tag = 'smem constant byte address 0x4 - core index']
  #allocation1 [shape = 'u32[144,128]{1,0:T(1,128)}', space=vmem, size = 0x12000, scoped, tag = 'internal scratch']
  %s0 = inlined_call_operand.hbm [shape: f32[200,784], index: 0, kind: input, shape index: {}]
  %s1 = inlined_call_operand.vmem [shape: f32[784,10], index: 1, kind: input, shape index: {}]
  %s2 = inlined_call_operand.vmem [shape: f32[1,10], index: 2, kind: input, shape index: {}]
  %s3 = inlined_call_operand.vmem [shape: f32[200,10], index: 3, kind: output, shape index: {}]
  %s4 = sld [smem:[#allocation0]]
  $region97: #{mnist_logistic_forward.1} parent=0
    _
  %s6 = ssub.s32 1, %s4
  %s7 = scalar_select 0, %s6, %s4
  $region1: #{mnist_logistic_forward.1} parent=0
    #allocation2 [shape = 'u8[802816]{0}', space=vmem, size = 0xc4000, scoped, tag = 'input window, operand 0']
    #allocation3 [shape = 's32[2]{0}', space=sflag, size = 0x8, scoped, tag = 'scoped memory for mnist_logistic_forward.1']
    #allocation4 [shape = 'u8[114688]{0}', space=vmem, size = 0x1c000, scoped, tag = 'output window, operand 0']
    %8 = vsyncpa [#allocation3], 0
    %s9 = scalar_lea.sflag [#allocation3], 1
    %10 = vsyncpa %s9, 0
    loop: start=0, step=1, limit=4
    $region2: #{mnist_logistic_forward.1} parent=1 // loop_pre_header
      _
    $region3: #{mnist_logistic_forward.1} parent=1 // loop_header
      %s12 = sphi 0, %s16
      %p13 = scmp.ge.s32.totalorder %s12, 4
      %s22 = sphi 0, %s24
      %s25 = sphi 0, %s22
      %s26 = sphi 0, %s25
      %s42 = sphi 0, %s26
      %s46 = sphi 0, %s46
      %s48 = sphi 0, %s46
      %s49 = sphi 0, %s48
      %s63 = sphi 0, %s49
      %s67 = sphi 0, %s67
      %s69 = sphi 0, %s67
      %s70 = sphi 0, %s69
      %s84 = sphi 0, %s70
      %s90 = sphi 0, %s92
      %s93 = sphi 0, %s90
      %s94 = sphi 0, %s93
      %s110 = sphi 0, %s94
    $region4: #{mnist_logistic_forward.1} parent=1 // loop_header_branch
      %15 = sbr.rel (%p13) target = $region8
    $region5: #{mnist_logistic_forward.1} parent=1 // loop_body
      %s17 = ssub.s32 %s12, 1
      %s18 = ssub.s32 %s12, 2
      %s19 = sadd.s32 %s12, 1
      %s20 = ssub.s32 %s12, %s19
      %p21 = scmp.eq.s32.totalorder %s20, 0
      %s23 = sadd.s32 %s22, 1
      %s24 = scalar_select %p21, %s22, %s23
      %p27 = pneg %p21
      %p28 = scmp.eq.s32.totalorder %s12, 1
      %p29 = por %p27, %p28
      %p30 = scmp.ne.s32.totalorder %s22, %s25
      %p31 = scmp.eq.s32.totalorder %s12, 0
      %p32 = por %p30, %p31
      %p33 = scmp.ne.s32.totalorder %s22, %s25
      %p34 = scmp.eq.s32.totalorder %s17, 1
      %p35 = por %p33, %p34
      %p36 = scmp.ne.s32.totalorder %s25, %s26
      %p37 = scmp.eq.s32.totalorder %s17, 0
      %p38 = por %p36, %p37
      %p39 = scmp.ne.s32.totalorder %s25, %s26
      %p40 = scmp.eq.s32.totalorder %s18, 1
      %p41 = por %p39, %p40
      %p43 = scmp.ne.s32.totalorder %s26, %s42
      %p44 = scmp.eq.s32.totalorder %s18, 0
      %p45 = por %p43, %p44
      %s47 = sadd.s32 %s46, 1
      %p50 = scmp.eq.s32.totalorder %s12, 1
      %p51 = scmp.ne.s32.totalorder %s46, %s48
      %p52 = scmp.eq.s32.totalorder %s12, 0
      %p53 = por %p51, %p52
      %p54 = scmp.ne.s32.totalorder %s46, %s48
      %p55 = scmp.eq.s32.totalorder %s17, 1
      %p56 = por %p54, %p55
      %p57 = scmp.ne.s32.totalorder %s48, %s49
      %p58 = scmp.eq.s32.totalorder %s17, 0
      %p59 = por %p57, %p58
      %p60 = scmp.ne.s32.totalorder %s48, %s49
      %p61 = scmp.eq.s32.totalorder %s18, 1
      %p62 = por %p60, %p61
      %p64 = scmp.ne.s32.totalorder %s49, %s63
      %p65 = scmp.eq.s32.totalorder %s18, 0
      %p66 = por %p64, %p65
      %s68 = sadd.s32 %s67, 1
      %p71 = scmp.eq.s32.totalorder %s12, 1
      %p72 = scmp.ne.s32.totalorder %s67, %s69
      %p73 = scmp.eq.s32.totalorder %s12, 0
      %p74 = por %p72, %p73
      %p75 = scmp.ne.s32.totalorder %s67, %s69
      %p76 = scmp.eq.s32.totalorder %s17, 1
      %p77 = por %p75, %p76
      %p78 = scmp.ne.s32.totalorder %s69, %s70
      %p79 = scmp.eq.s32.totalorder %s17, 0
      %p80 = por %p78, %p79
      %p81 = scmp.ne.s32.totalorder %s69, %s70
      %p82 = scmp.eq.s32.totalorder %s18, 1
      %p83 = por %p81, %p82
      %p85 = scmp.ne.s32.totalorder %s70, %s84
      %p86 = scmp.eq.s32.totalorder %s18, 0
      %p87 = por %p85, %p86
      %s88 = ssub.s32 %s12, %s19
      %p89 = scmp.eq.s32.totalorder %s88, 0
      %s91 = sadd.s32 %s90, 1
      %s92 = scalar_select %p89, %s90, %s91
      %p95 = pneg %p89
      %p96 = scmp.eq.s32.totalorder %s12, 1
      %p97 = por %p95, %p96
      %p98 = scmp.ne.s32.totalorder %s90, %s93
      %p99 = scmp.eq.s32.totalorder %s12, 0
      %p100 = por %p98, %p99
      %p101 = scmp.ne.s32.totalorder %s90, %s93
      %p102 = scmp.eq.s32.totalorder %s17, 1
      %p103 = por %p101, %p102
      %p104 = scmp.ne.s32.totalorder %s93, %s94
      %p105 = scmp.eq.s32.totalorder %s17, 0
      %p106 = por %p104, %p105
      %p107 = scmp.ne.s32.totalorder %s93, %s94
      %p108 = scmp.eq.s32.totalorder %s18, 1
      %p109 = por %p107, %p108
      %p111 = scmp.ne.s32.totalorder %s94, %s110
      %p112 = scmp.eq.s32.totalorder %s18, 0
      %p113 = por %p111, %p112
      %p114 = scmp.le.s32.totalorder 1, %s12
      %p115 = scmp.lt.s32.totalorder %s12, 3
      %p116 = pnand %p114, %p115
      %p117 = pneg %p116
      // Predicated region
      $region9: #{mnist_logistic_forward.1} parent=5 // pred_check
        _
      $region10: #{mnist_logistic_forward.1} parent=5 // pred_check_branch
        %119 = sbr.rel (%p116) target = $region12
      $region11: #{mnist_logistic_forward.1} parent=5 // pred_region
        %s120 = ssub.s32 %s12, 1
        // Predicated region
        $region13: #{mnist_logistic_forward.1} parent=11 // pred_check
          %p121 = pneg %p59
        $region14: #{mnist_logistic_forward.1} parent=11 // pred_check_branch
          %123 = sbr.rel (%p121) target = $region16
        $region15: #{mnist_logistic_forward.1} parent=11 // pred_region
          _
        $region16: #{mnist_logistic_forward.1} parent=11 // pred_fallthru
          _
        // Predicated region
        $region17: #{mnist_logistic_forward.1} parent=11 // pred_check
          %p124 = pneg %p80
        $region18: #{mnist_logistic_forward.1} parent=11 // pred_check_branch
          %126 = sbr.rel (%p124) target = $region20
        $region19: #{mnist_logistic_forward.1} parent=11 // pred_region
          _
        $region20: #{mnist_logistic_forward.1} parent=11 // pred_fallthru
          _
      $region12: #{mnist_logistic_forward.1} parent=5 // pred_fallthru
        _
      %p127 = scmp.lt.s32.totalorder %s12, 2
      // Predicated region
      $region21: #{mnist_logistic_forward.1} parent=5 // pred_check
        %p128 = pneg %p127
      $region22: #{mnist_logistic_forward.1} parent=5 // pred_check_branch
        %130 = sbr.rel (%p128) target = $region24
      $region23: #{mnist_logistic_forward.1} parent=5 // pred_region
        // Predicated region
        $region25: #{mnist_logistic_forward.1} parent=23 // pred_check
          %p131 = pneg %p32
        $region26: #{mnist_logistic_forward.1} parent=23 // pred_check_branch
          %133 = sbr.rel (%p131) target = $region28
        $region27: #{mnist_logistic_forward.1} parent=23 // pred_region
          %s134 = sand.u32 %s22, 1
          %s135 = scalar_lea.sflag [#allocation3], %s134
          %s136 = sand.u32 %s22, 1
          %s137 = smul.addr %s136, 784
          %s138 = scalar_lea.vmem [#allocation2], %s137
          %s139 = smul.u32 14, %s12
          %s140 = ssub.s32 25, %s139
          %p141 = scmp.lt.s32.totalorder %s140, 14
          %s142 = scalar_select %p141, %s140, 14
          %s143 = smul.u32 128, %s142
          %s144 = smul.u32 %s143, 7
          %s146 = ssub.s32 12544, %s144
          %147 = vsyncadd %s135, %s146
          %p148 = scmp.ne.s32.totalorder 0, %s144
          %s149 = smul.addr %s139, 7
          %s150 = smul.addr %s149, 128
          %s151 = scalar_lea.hbm %s0, %s150
          %s152 = smul.u32 56, %s142
          %s153 = sshll.u32 %s138, 4
          %s154 = int_to_ptr.vmem [resolvable:$true] %s153
          %s155 = sshll.u32 %s152, 4
          %159 = dma.hbm_to_vmem [thread:$0]  (%p148), %s151, %s155, %s154, %s135, 896, 896, 56
        $region28: #{mnist_logistic_forward.1} parent=23 // pred_fallthru
          _
      $region24: #{mnist_logistic_forward.1} parent=5 // pred_fallthru
        _
      %p160 = scmp.le.s32.totalorder 1, %s12
      %p161 = scmp.lt.s32.totalorder %s12, 3
      %p162 = pnand %p160, %p161
      %p163 = pneg %p162
      // Predicated region
      $region29: #{mnist_logistic_forward.1} parent=5 // pred_check
        _
      $region30: #{mnist_logistic_forward.1} parent=5 // pred_check_branch
        %165 = sbr.rel (%p162) target = $region32
      $region31: #{mnist_logistic_forward.1} parent=5 // pred_region
        %s166 = ssub.s32 %s12, 1
        %s167 = sand.u32 %s25, 1
        %s168 = scalar_lea.sflag [#allocation3], %s167
        %s169 = sand.u32 %s25, 1
        %s170 = smul.addr %s169, 784
        %s171 = scalar_lea.vmem [#allocation2], %s170
        // Predicated region
        $region33: #{mnist_logistic_forward.1} parent=31 // pred_check
          %p172 = pneg %p38
        $region34: #{mnist_logistic_forward.1} parent=31 // pred_check_branch
          %174 = sbr.rel (%p172) target = $region36
        $region35: #{mnist_logistic_forward.1} parent=31 // pred_region
          %175 = dma.done %s168, 12544
        $region36: #{mnist_logistic_forward.1} parent=31 // pred_fallthru
          _
        %s176 = sand.u32 %s25, 1
        %s177 = scalar_lea.sflag [#allocation3], %s176
        %s178 = sand.u32 %s25, 1
        %s179 = smul.addr %s178, 784
        %s180 = scalar_lea.vmem [#allocation2], %s179
        %p181 = pneg %p38
        %p182 = pneg %p35
        %p183 = pneg %p59
        %p184 = pneg %p56
        %p185 = pneg %p80
        %p186 = pneg %p77
        %p187 = pneg %p106
        %p188 = pneg %p103
        %s189 = sand.u32 %s93, 1
        %s190 = sand.u32 %s93, 1
        %s191 = smul.addr %s190, 112
        %s192 = scalar_lea.vmem [#allocation4], %s191
        %s193 = smul.u32 14, %s17
        %s194 = ssub.s32 25, %s193
        %p195 = scmp.lt.s32.totalorder %s194, 14
        %s196 = scalar_select %p195, %s194, 14
        %s197 = smul.u32 128, %s196
        %s198 = smul.u32 %s197, 7
        %s199 = smul.u32 14, %s17
        %s200 = ssub.s32 25, %s199
        %p201 = scmp.lt.s32.totalorder %s200, 14
        %s202 = scalar_select %p201, %s200, 14
        %s203 = smul.u32 128, %s202
        %v204 = vld [vmem:[%s171] sm:$0xff]
        %v205 = vld [vmem:[%s171 + $0x8] sm:$0xff]
        %v206 = vld [vmem:[%s171 + $0x10] sm:$0xff]
        %v207 = vld [vmem:[%s171 + $0x18] sm:$0xff]
        %v208 = vld [vmem:[%s171 + $0x20] sm:$0xff]
        %v209 = vld [vmem:[%s171 + $0x28] sm:$0xff]
        %v210 = vld [vmem:[%s171 + $0x30] sm:$0xff]
        %v211 = vld [vmem:[%s171 + $0x38] sm:$0xff]
        %v212 = vld [vmem:[%s171 + $0x40] sm:$0xff]
        %v213 = vld [vmem:[%s171 + $0x48] sm:$0xff]
        %v214 = vld [vmem:[%s171 + $0x50] sm:$0xff]
        %v215 = vld [vmem:[%s171 + $0x58] sm:$0xff]
        %v216 = vld [vmem:[%s171 + $0x60] sm:$0xff]
        %v217 = vld [vmem:[%s171 + $0x68] sm:$0xff]
        %v218 = vld [vmem:[%s171 + $0x70] sm:$0xff]
        %v219 = vld [vmem:[%s171 + $0x78] sm:$0xff]
        %v220 = vld [vmem:[%s171 + $0x80] sm:$0xff]
        %v221 = vld [vmem:[%s171 + $0x88] sm:$0xff]
        %v222 = vld [vmem:[%s171 + $0x90] sm:$0xff]
        %v223 = vld [vmem:[%s171 + $0x98] sm:$0xff]
        %v224 = vld [vmem:[%s171 + $0xa0] sm:$0xff]
        %v225 = vld [vmem:[%s171 + $0xa8] sm:$0xff]
        %v226 = vld [vmem:[%s171 + $0xb0] sm:$0xff]
        %v227 = vld [vmem:[%s171 + $0xb8] sm:$0xff]
        %v228 = vld [vmem:[%s171 + $0xc0] sm:$0xff]
        %v229 = vld [vmem:[%s171 + $0xc8] sm:$0xff]
        %v230 = vld [vmem:[%s171 + $0xd0] sm:$0xff]
        %v231 = vld [vmem:[%s171 + $0xd8] sm:$0xff]
        %v232 = vld [vmem:[%s171 + $0xe0] sm:$0xff]
        %v233 = vld [vmem:[%s171 + $0xe8] sm:$0xff]
        %v234 = vld [vmem:[%s171 + $0xf0] sm:$0xff]
        %v235 = vld [vmem:[%s171 + $0xf8] sm:$0xff]
        %v236 = vld [vmem:[%s171 + $0x100] sm:$0xff]
        %v237 = vld [vmem:[%s171 + $0x108] sm:$0xff]
        %v238 = vld [vmem:[%s171 + $0x110] sm:$0xff]
        %v239 = vld [vmem:[%s171 + $0x118] sm:$0xff]
        %v240 = vld [vmem:[%s171 + $0x120] sm:$0xff]
        %v241 = vld [vmem:[%s171 + $0x128] sm:$0xff]
        %v242 = vld [vmem:[%s171 + $0x130] sm:$0xff]
        %v243 = vld [vmem:[%s171 + $0x138] sm:$0xff]
        %v244 = vld [vmem:[%s171 + $0x140] sm:$0xff]
        %v245 = vld [vmem:[%s171 + $0x148] sm:$0xff]
        %v246 = vld [vmem:[%s171 + $0x150] sm:$0xff]
        %v247 = vld [vmem:[%s171 + $0x158] sm:$0xff]
        %v248 = vld [vmem:[%s171 + $0x160] sm:$0xff]
        %v249 = vld [vmem:[%s171 + $0x168] sm:$0xff]
        %v250 = vld [vmem:[%s171 + $0x170] sm:$0xff]
        %v251 = vld [vmem:[%s171 + $0x178] sm:$0xff]
        %v252 = vld [vmem:[%s171 + $0x180] sm:$0xff]
        %v253 = vld [vmem:[%s171 + $0x188] sm:$0xff]
        %v254 = vld [vmem:[%s171 + $0x190] sm:$0xff]
        %v255 = vld [vmem:[%s171 + $0x198] sm:$0xff]
        %v256 = vld [vmem:[%s171 + $0x1a0] sm:$0xff]
        %v257 = vld [vmem:[%s171 + $0x1a8] sm:$0xff]
        %v258 = vld [vmem:[%s171 + $0x1b0] sm:$0xff]
        %v259 = vld [vmem:[%s171 + $0x1b8] sm:$0xff]
        %v260 = vld [vmem:[%s171 + $0x1c0] sm:$0xff]
        %v261 = vld [vmem:[%s171 + $0x1c8] sm:$0xff]
        %v262 = vld [vmem:[%s171 + $0x1d0] sm:$0xff]
        %v263 = vld [vmem:[%s171 + $0x1d8] sm:$0xff]
        %v264 = vld [vmem:[%s171 + $0x1e0] sm:$0xff]
        %v265 = vld [vmem:[%s171 + $0x1e8] sm:$0xff]
        %v266 = vld [vmem:[%s171 + $0x1f0] sm:$0xff]
        %v267 = vld [vmem:[%s171 + $0x1f8] sm:$0xff]
        %v268 = vld [vmem:[%s171 + $0x200] sm:$0xff]
        %v269 = vld [vmem:[%s171 + $0x208] sm:$0xff]
        %v270 = vld [vmem:[%s171 + $0x210] sm:$0xff]
        %v271 = vld [vmem:[%s171 + $0x218] sm:$0xff]
        %v272 = vld [vmem:[%s171 + $0x220] sm:$0xff]
        %v273 = vld [vmem:[%s171 + $0x228] sm:$0xff]
        %v274 = vld [vmem:[%s171 + $0x230] sm:$0xff]
        %v275 = vld [vmem:[%s171 + $0x238] sm:$0xff]
        %v276 = vld [vmem:[%s171 + $0x240] sm:$0xff]
        %v277 = vld [vmem:[%s171 + $0x248] sm:$0xff]
        %v278 = vld [vmem:[%s171 + $0x250] sm:$0xff]
        %v279 = vld [vmem:[%s171 + $0x258] sm:$0xff]
        %v280 = vld [vmem:[%s171 + $0x260] sm:$0xff]
        %v281 = vld [vmem:[%s171 + $0x268] sm:$0xff]
        %v282 = vld [vmem:[%s171 + $0x270] sm:$0xff]
        %v283 = vld [vmem:[%s171 + $0x278] sm:$0xff]
        %v284 = vld [vmem:[%s171 + $0x280] sm:$0xff]
        %v285 = vld [vmem:[%s171 + $0x288] sm:$0xff]
        %v286 = vld [vmem:[%s171 + $0x290] sm:$0xff]
        %v287 = vld [vmem:[%s171 + $0x298] sm:$0xff]
        %v288 = vld [vmem:[%s171 + $0x2a0] sm:$0xff]
        %v289 = vld [vmem:[%s171 + $0x2a8] sm:$0xff]
        %v290 = vld [vmem:[%s171 + $0x2b0] sm:$0xff]
        %v291 = vld [vmem:[%s171 + $0x2b8] sm:$0xff]
        %v292 = vld [vmem:[%s171 + $0x2c0] sm:$0xff]
        %v293 = vld [vmem:[%s171 + $0x2c8] sm:$0xff]
        %v294 = vld [vmem:[%s171 + $0x2d0] sm:$0xff]
        %v295 = vld [vmem:[%s171 + $0x2d8] sm:$0xff]
        %v296 = vld [vmem:[%s171 + $0x2e0] sm:$0xff]
        %v297 = vld [vmem:[%s171 + $0x2e8] sm:$0xff]
        %v298 = vld [vmem:[%s171 + $0x2f0] sm:$0xff]
        %v299 = vld [vmem:[%s171 + $0x2f8] sm:$0xff]
        %v300 = vld [vmem:[%s171 + $0x300] sm:$0xff]
        %v301 = vld [vmem:[%s171 + $0x308] sm:$0xff]
        %v302 = vld [vmem:[%s1] sm:$0xff]
        %v303 = vld [vmem:[%s1 + $0x8] sm:$0xff]
        %v304 = vld [vmem:[%s1 + $0x10] sm:$0xff]
        %v305 = vld [vmem:[%s1 + $0x18] sm:$0xff]
        %v306 = vld [vmem:[%s1 + $0x20] sm:$0xff]
        %v307 = vld [vmem:[%s1 + $0x28] sm:$0xff]
        %v308 = vld [vmem:[%s1 + $0x30] sm:$0xff]
        %v309 = vld [vmem:[%s1 + $0x38] sm:$0xff]
        %v310 = vld [vmem:[%s1 + $0x40] sm:$0xff]
        %v311 = vld [vmem:[%s1 + $0x48] sm:$0xff]
        %v312 = vld [vmem:[%s1 + $0x50] sm:$0xff]
        %v313 = vld [vmem:[%s1 + $0x58] sm:$0xff]
        %v314 = vld [vmem:[%s1 + $0x60] sm:$0xff]
        %v315 = vld [vmem:[%s1 + $0x68] sm:$0xff]
        %v316 = vld [vmem:[%s1 + $0x70] sm:$0xff]
        %v317 = vld [vmem:[%s1 + $0x78] sm:$0xff]
        %v318 = vld [vmem:[%s1 + $0x80] sm:$0xff]
        %v319 = vld [vmem:[%s1 + $0x88] sm:$0xff]
        %v320 = vld [vmem:[%s1 + $0x90] sm:$0xff]
        %v321 = vld [vmem:[%s1 + $0x98] sm:$0xff]
        %v322 = vld [vmem:[%s1 + $0xa0] sm:$0xff]
        %v323 = vld [vmem:[%s1 + $0xa8] sm:$0xff]
        %v324 = vld [vmem:[%s1 + $0xb0] sm:$0xff]
        %v325 = vld [vmem:[%s1 + $0xb8] sm:$0xff]
        %v326 = vld [vmem:[%s1 + $0xc0] sm:$0xff]
        %v327 = vld [vmem:[%s1 + $0xc8] sm:$0xff]
        %v328 = vld [vmem:[%s1 + $0xd0] sm:$0xff]
        %v329 = vld [vmem:[%s1 + $0xd8] sm:$0xff]
        %v330 = vld [vmem:[%s1 + $0xe0] sm:$0xff]
        %v331 = vld [vmem:[%s1 + $0xe8] sm:$0xff]
        %v332 = vld [vmem:[%s1 + $0xf0] sm:$0xff]
        %v333 = vld [vmem:[%s1 + $0xf8] sm:$0xff]
        %v334 = vld [vmem:[%s1 + $0x100] sm:$0xff]
        %v335 = vld [vmem:[%s1 + $0x108] sm:$0xff]
        %v336 = vld [vmem:[%s1 + $0x110] sm:$0xff]
        %v337 = vld [vmem:[%s1 + $0x118] sm:$0xff]
        %v338 = vld [vmem:[%s1 + $0x120] sm:$0xff]
        %v339 = vld [vmem:[%s1 + $0x128] sm:$0xff]
        %v340 = vld [vmem:[%s1 + $0x130] sm:$0xff]
        %v341 = vld [vmem:[%s1 + $0x138] sm:$0xff]
        %v342 = vld [vmem:[%s1 + $0x140] sm:$0xff]
        %v343 = vld [vmem:[%s1 + $0x148] sm:$0xff]
        %v344 = vld [vmem:[%s1 + $0x150] sm:$0xff]
        %v345 = vld [vmem:[%s1 + $0x158] sm:$0xff]
        %v346 = vld [vmem:[%s1 + $0x160] sm:$0xff]
        %v347 = vld [vmem:[%s1 + $0x168] sm:$0xff]
        %v348 = vld [vmem:[%s1 + $0x170] sm:$0xff]
        %v349 = vld [vmem:[%s1 + $0x178] sm:$0xff]
        %v350 = vld [vmem:[%s1 + $0x180] sm:$0xff]
        %v351 = vld [vmem:[%s1 + $0x188] sm:$0xff]
        %v352 = vld [vmem:[%s1 + $0x190] sm:$0xff]
        %v353 = vld [vmem:[%s1 + $0x198] sm:$0xff]
        %v354 = vld [vmem:[%s1 + $0x1a0] sm:$0xff]
        %v355 = vld [vmem:[%s1 + $0x1a8] sm:$0xff]
        %v356 = vld [vmem:[%s1 + $0x1b0] sm:$0xff]
        %v357 = vld [vmem:[%s1 + $0x1b8] sm:$0xff]
        %v358 = vld [vmem:[%s1 + $0x1c0] sm:$0xff]
        %v359 = vld [vmem:[%s1 + $0x1c8] sm:$0xff]
        %v360 = vld [vmem:[%s1 + $0x1d0] sm:$0xff]
        %v361 = vld [vmem:[%s1 + $0x1d8] sm:$0xff]
        %v362 = vld [vmem:[%s1 + $0x1e0] sm:$0xff]
        %v363 = vld [vmem:[%s1 + $0x1e8] sm:$0xff]
        %v364 = vld [vmem:[%s1 + $0x1f0] sm:$0xff]
        %v365 = vld [vmem:[%s1 + $0x1f8] sm:$0xff]
        %v366 = vld [vmem:[%s1 + $0x200] sm:$0xff]
        %v367 = vld [vmem:[%s1 + $0x208] sm:$0xff]
        %v368 = vld [vmem:[%s1 + $0x210] sm:$0xff]
        %v369 = vld [vmem:[%s1 + $0x218] sm:$0xff]
        %v370 = vld [vmem:[%s1 + $0x220] sm:$0xff]
        %v371 = vld [vmem:[%s1 + $0x228] sm:$0xff]
        %v372 = vld [vmem:[%s1 + $0x230] sm:$0xff]
        %v373 = vld [vmem:[%s1 + $0x238] sm:$0xff]
        %v374 = vld [vmem:[%s1 + $0x240] sm:$0xff]
        %v375 = vld [vmem:[%s1 + $0x248] sm:$0xff]
        %v376 = vld [vmem:[%s1 + $0x250] sm:$0xff]
        %v377 = vld [vmem:[%s1 + $0x258] sm:$0xff]
        %v378 = vld [vmem:[%s1 + $0x260] sm:$0xff]
        %v379 = vld [vmem:[%s1 + $0x268] sm:$0xff]
        %v380 = vld [vmem:[%s1 + $0x270] sm:$0xff]
        %v381 = vld [vmem:[%s1 + $0x278] sm:$0xff]
        %v382 = vld [vmem:[%s1 + $0x280] sm:$0xff]
        %v383 = vld [vmem:[%s1 + $0x288] sm:$0xff]
        %v384 = vld [vmem:[%s1 + $0x290] sm:$0xff]
        %v385 = vld [vmem:[%s1 + $0x298] sm:$0xff]
        %v386 = vld [vmem:[%s1 + $0x2a0] sm:$0xff]
        %v387 = vld [vmem:[%s1 + $0x2a8] sm:$0xff]
        %v388 = vld [vmem:[%s1 + $0x2b0] sm:$0xff]
        %v389 = vld [vmem:[%s1 + $0x2b8] sm:$0xff]
        %v390 = vld [vmem:[%s1 + $0x2c0] sm:$0xff]
        %v391 = vld [vmem:[%s1 + $0x2c8] sm:$0xff]
        %v392 = vld [vmem:[%s1 + $0x2d0] sm:$0xff]
        %v393 = vld [vmem:[%s1 + $0x2d8] sm:$0xff]
        %v394 = vld [vmem:[%s1 + $0x2e0] sm:$0xff]
        %v395 = vld [vmem:[%s1 + $0x2e8] sm:$0xff]
        %v396 = vld [vmem:[%s1 + $0x2f0] sm:$0xff]
        %v397 = vld [vmem:[%s1 + $0x2f8] sm:$0xff]
        %v398 = vld [vmem:[%s1 + $0x300] sm:$0xff]
        %v399 = vld [vmem:[%s1 + $0x308] sm:$0xff]
        %v400 = vld [vmem:[%s2] sm:$0x1]
        %v402 = vlaneseq
        %v403 = vshrl.u32 %v402, 7
        %v404 = vsub.s32 0, %v403
        %v405 = vrot.slane %v400, %v404
        %vm407 = vcmask 130048
        %v409 = vsel %vm407, %v210, 0
        %v412 = vsel %vm407, %v217, 0
        %v415 = vsel %vm407, %v224, 0
        %v418 = vsel %vm407, %v231, 0
        %v421 = vsel %vm407, %v238, 0
        %v424 = vsel %vm407, %v245, 0
        %v427 = vsel %vm407, %v252, 0
        %v430 = vsel %vm407, %v259, 0
        %v433 = vsel %vm407, %v266, 0
        %v436 = vsel %vm407, %v273, 0
        %v439 = vsel %vm407, %v280, 0
        %v442 = vsel %vm407, %v287, 0
        %v445 = vsel %vm407, %v294, 0
        %v448 = vsel %vm407, %v301, 0
        %450 = vmatprep.subr.mxu0 0.0
        %451 = vmatpush1.msra.mxu0 %v302
        %452 = vmatprep.subr.mxu0 0.0
        %453 = vmatpush1.msra.mxu0 %v303
        %454 = vmatprep.subr.mxu0 0.0
        %455 = vmatpush1.msra.mxu0 %v304
        %456 = vmatprep.subr.mxu0 0.0
        %457 = vmatpush1.msra.mxu0 %v305
        %458 = vmatprep.subr.mxu0 0.0
        %459 = vmatpush1.msra.mxu0 %v306
        %460 = vmatprep.subr.mxu0 0.0
        %461 = vmatpush1.msra.mxu0 %v307
        %462 = vmatprep.subr.mxu0 0.0
        %463 = vmatpush1.msra.mxu0 %v308
        %464 = vmatprep.subr.mxu0 0.0
        %465 = vmatpush1.msra.mxu0 %v309
        %466 = vmatprep.subr.mxu0 0.0
        %467 = vmatpush1.msra.mxu0 %v310
        %468 = vmatprep.subr.mxu0 0.0
        %469 = vmatpush1.msra.mxu0 %v311
        %470 = vmatprep.subr.mxu0 0.0
        %471 = vmatpush1.msra.mxu0 %v312
        %472 = vmatprep.subr.mxu0 0.0
        %473 = vmatpush1.msra.mxu0 %v313
        %474 = vmatprep.subr.mxu0 0.0
        %475 = vmatpush1.msra.mxu0 %v314
        %476 = vmatprep.subr.mxu0 0.0
        %477 = vmatpush1.msra.mxu0 %v315
        %478 = vmatprep.subr.mxu0 0.0
        %479 = vmatpush1.msra.mxu0 %v316
        %480 = vmatprep.subr.mxu0 0.0
        %481 = vmatpush1.msra.mxu0 %v317
        %482 = vmatprep.subr.mxu0 0.0
        %483 = vmatpush1.msra.mxu0 %v318
        %484 = vmatprep.subr.mxu0 0.0
        %485 = vmatpush1.msra.mxu0 %v319
        %486 = vmatprep.subr.mxu0 0.0
        %487 = vmatpush1.msra.mxu0 %v320
        %488 = vmatprep.subr.mxu0 0.0
        %489 = vmatpush1.msra.mxu0 %v321
        %490 = vmatprep.subr.mxu0 0.0
        %491 = vmatpush1.msra.mxu0 %v322
        %492 = vmatprep.subr.mxu0 0.0
        %493 = vmatpush1.msra.mxu0 %v323
        %494 = vmatprep.subr.mxu0 0.0
        %495 = vmatpush1.msra.mxu0 %v324
        %496 = vmatprep.subr.mxu0 0.0
        %497 = vmatpush1.msra.mxu0 %v325
        %498 = vmatprep.subr.mxu0 0.0
        %499 = vmatpush1.msra.mxu0 %v326
        %500 = vmatprep.subr.mxu0 0.0
        %501 = vmatpush1.msra.mxu0 %v327
        %502 = vmatprep.subr.mxu0 0.0
        %503 = vmatpush1.msra.mxu0 %v328
        %504 = vmatprep.subr.mxu0 0.0
        %505 = vmatpush1.msra.mxu0 %v329
        %506 = vmatprep.subr.mxu0 0.0
        %507 = vmatpush1.msra.mxu0 %v330
        %508 = vmatprep.subr.mxu0 0.0
        %509 = vmatpush1.msra.mxu0 %v331
        %510 = vmatprep.subr.mxu0 0.0
        %511 = vmatpush1.msra.mxu0 %v332
        %512 = vmatprep.subr.mxu0 0.0
        %513 = vmatpush1.msra.mxu0 %v333
        %514 = vmatprep.mubr.f32.mxu0 %v205
        %515 = vmatmul.mubr.f32.gmra.mrb[0].mxu0 %v204
        %v516 = vpop.f32.mrb[0].mxu0
        %v517 = vadd.f32 %v405, %v516
        %v518 = vpop.f32.mrb[0].mxu0
        %519 = vmatprep.mubr.f32.mxu0 %v212
        %520 = vmatmul.mubr.f32.gmra.mrb[0].mxu0 %v211
        %v521 = vpop.f32.mrb[0].mxu0
        %v522 = vadd.f32 %v405, %v521
        %v523 = vpop.f32.mrb[0].mxu0
        %524 = vmatprep.mubr.f32.mxu0 %v219
        %525 = vmatmul.mubr.f32.gmra.mrb[0].mxu0 %v218
        %v526 = vpop.f32.mrb[0].mxu0
        %v527 = vadd.f32 %v405, %v526
        %v528 = vpop.f32.mrb[0].mxu0
        %529 = vmatprep.mubr.f32.mxu0 %v226
        %530 = vmatmul.mubr.f32.gmra.mrb[0].mxu0 %v225
        %v531 = vpop.f32.mrb[0].mxu0
        %v532 = vadd.f32 %v405, %v531
        %v533 = vpop.f32.mrb[0].mxu0
        %534 = vmatprep.mubr.f32.mxu0 %v233
        %535 = vmatmul.mubr.f32.gmra.mrb[0].mxu0 %v232
        %v536 = vpop.f32.mrb[0].mxu0
        %v537 = vadd.f32 %v405, %v536
        %v538 = vpop.f32.mrb[0].mxu0
        %539 = vmatprep.mubr.f32.mxu0 %v240
        %540 = vmatmul.mubr.f32.gmra.mrb[0].mxu0 %v239
        %v541 = vpop.f32.mrb[0].mxu0
        %v542 = vadd.f32 %v405, %v541
        %v543 = vpop.f32.mrb[0].mxu0
        %544 = vmatprep.mubr.f32.mxu0 %v247
        %545 = vmatmul.mubr.f32.gmra.mrb[0].mxu0 %v246
        %v546 = vpop.f32.mrb[0].mxu0
        %v547 = vadd.f32 %v405, %v546
        %v548 = vpop.f32.mrb[0].mxu0
        %549 = vmatprep.mubr.f32.mxu0 %v254
        %550 = vmatmul.mubr.f32.gmra.mrb[0].mxu0 %v253
        %v551 = vpop.f32.mrb[0].mxu0
        %v552 = vadd.f32 %v405, %v551
        %v553 = vpop.f32.mrb[0].mxu0
        %554 = vmatprep.mubr.f32.mxu0 %v261
        %555 = vmatmul.mubr.f32.gmra.mrb[0].mxu0 %v260
        %v556 = vpop.f32.mrb[0].mxu0
        %v557 = vadd.f32 %v405, %v556
        %v558 = vpop.f32.mrb[0].mxu0
        %559 = vmatprep.mubr.f32.mxu0 %v268
        %560 = vmatmul.mubr.f32.gmra.mrb[0].mxu0 %v267
        %v561 = vpop.f32.mrb[0].mxu0
        %v562 = vadd.f32 %v405, %v561
        %v563 = vpop.f32.mrb[0].mxu0
        %564 = vmatprep.mubr.f32.mxu0 %v275
        %565 = vmatmul.mubr.f32.gmra.mrb[0].mxu0 %v274
        %v566 = vpop.f32.mrb[0].mxu0
        %v567 = vadd.f32 %v405, %v566
        %v568 = vpop.f32.mrb[0].mxu0
        %569 = vmatprep.mubr.f32.mxu0 %v282
        %570 = vmatmul.mubr.f32.gmra.mrb[0].mxu0 %v281
        %v571 = vpop.f32.mrb[0].mxu0
        %v572 = vadd.f32 %v405, %v571
        %v573 = vpop.f32.mrb[0].mxu0
        %574 = vmatprep.mubr.f32.mxu0 %v289
        %575 = vmatmul.mubr.f32.gmra.mrb[0].mxu0 %v288
        %v576 = vpop.f32.mrb[0].mxu0
        %v577 = vadd.f32 %v405, %v576
        %v578 = vpop.f32.mrb[0].mxu0
        %579 = vmatprep.mubr.f32.mxu0 %v296
        %580 = vmatmul.mubr.f32.gmra.mrb[0].mxu0 %v295
        %v581 = vpop.f32.mrb[0].mxu0
        %v582 = vadd.f32 %v405, %v581
        %v583 = vpop.f32.mrb[0].mxu0
        %584 = vdwg.mxu0
        %585 = vmatprep.subr.mxu0 0.0
        %586 = vmatpush1.msra.mxu0 %v334
        %587 = vmatprep.subr.mxu0 0.0
        %588 = vmatpush1.msra.mxu0 %v335
        %589 = vmatprep.subr.mxu0 0.0
        %590 = vmatpush1.msra.mxu0 %v336
        %591 = vmatprep.subr.mxu0 0.0
        %592 = vmatpush1.msra.mxu0 %v337
        %593 = vmatprep.subr.mxu0 0.0
        %594 = vmatpush1.msra.mxu0 %v338
        %595 = vmatprep.subr.mxu0 0.0
        %596 = vmatpush1.msra.mxu0 %v339
        %597 = vmatprep.subr.mxu0 0.0
        %598 = vmatpush1.msra.mxu0 %v340
        %599 = vmatprep.subr.mxu0 0.0
        %600 = vmatpush1.msra.mxu0 %v341
        %601 = vmatprep.subr.mxu0 0.0
        %602 = vmatpush1.msra.mxu0 %v342
        %603 = vmatprep.subr.mxu0 0.0
        %604 = vmatpush1.msra.mxu0 %v343
        %605 = vmatprep.subr.mxu0 0.0
        %606 = vmatpush1.msra.mxu0 %v344
        %607 = vmatprep.subr.mxu0 0.0
        %608 = vmatpush1.msra.mxu0 %v345
        %609 = vmatprep.subr.mxu0 0.0
        %610 = vmatpush1.msra.mxu0 %v346
        %611 = vmatprep.subr.mxu0 0.0
        %612 = vmatpush1.msra.mxu0 %v347
        %613 = vmatprep.subr.mxu0 0.0
        %614 = vmatpush1.msra.mxu0 %v348
        %615 = vmatprep.subr.mxu0 0.0
        %616 = vmatpush1.msra.mxu0 %v349
        %617 = vmatprep.subr.mxu0 0.0
        %618 = vmatpush1.msra.mxu0 %v350
        %619 = vmatprep.subr.mxu0 0.0
        %620 = vmatpush1.msra.mxu0 %v351
        %621 = vmatprep.subr.mxu0 0.0
        %622 = vmatpush1.msra.mxu0 %v352
        %623 = vmatprep.subr.mxu0 0.0
        %624 = vmatpush1.msra.mxu0 %v353
        %625 = vmatprep.subr.mxu0 0.0
        %626 = vmatpush1.msra.mxu0 %v354
        %627 = vmatprep.subr.mxu0 0.0
        %628 = vmatpush1.msra.mxu0 %v355
        %629 = vmatprep.subr.mxu0 0.0
        %630 = vmatpush1.msra.mxu0 %v356
        %631 = vmatprep.subr.mxu0 0.0
        %632 = vmatpush1.msra.mxu0 %v357
        %633 = vmatprep.subr.mxu0 0.0
        %634 = vmatpush1.msra.mxu0 %v358
        %635 = vmatprep.subr.mxu0 0.0
        %636 = vmatpush1.msra.mxu0 %v359
        %637 = vmatprep.subr.mxu0 0.0
        %638 = vmatpush1.msra.mxu0 %v360
        %639 = vmatprep.subr.mxu0 0.0
        %640 = vmatpush1.msra.mxu0 %v361
        %641 = vmatprep.subr.mxu0 0.0
        %642 = vmatpush1.msra.mxu0 %v362
        %643 = vmatprep.subr.mxu0 0.0
        %644 = vmatpush1.msra.mxu0 %v363
        %645 = vmatprep.subr.mxu0 0.0
        %646 = vmatpush1.msra.mxu0 %v364
        %647 = vmatprep.subr.mxu0 0.0
        %648 = vmatpush1.msra.mxu0 %v365
        %649 = vmatprep.mubr.f32.mxu0 %v207
        %650 = vmatmul.mubr.f32.gmra.mrb[0].mxu0 %v206
        %v651 = vpop.f32.mrb[0].mxu0
        %v652 = vadd.f32 %v517, %v651
        %v653 = vpop.f32.mrb[0].mxu0
        %654 = vmatprep.mubr.f32.mxu0 %v214
        %655 = vmatmul.mubr.f32.gmra.mrb[0].mxu0 %v213
        %v656 = vpop.f32.mrb[0].mxu0
        %v657 = vadd.f32 %v522, %v656
        %v658 = vpop.f32.mrb[0].mxu0
        %659 = vmatprep.mubr.f32.mxu0 %v221
        %660 = vmatmul.mubr.f32.gmra.mrb[0].mxu0 %v220
        %v661 = vpop.f32.mrb[0].mxu0
        %v662 = vadd.f32 %v527, %v661
        %v663 = vpop.f32.mrb[0].mxu0
        %664 = vmatprep.mubr.f32.mxu0 %v228
        %665 = vmatmul.mubr.f32.gmra.mrb[0].mxu0 %v227
        %v666 = vpop.f32.mrb[0].mxu0
        %v667 = vadd.f32 %v532, %v666
        %v668 = vpop.f32.mrb[0].mxu0
        %669 = vmatprep.mubr.f32.mxu0 %v235
        %670 = vmatmul.mubr.f32.gmra.mrb[0].mxu0 %v234
        %v671 = vpop.f32.mrb[0].mxu0
        %v672 = vadd.f32 %v537, %v671
        %v673 = vpop.f32.mrb[0].mxu0
        %674 = vmatprep.mubr.f32.mxu0 %v242
        %675 = vmatmul.mubr.f32.gmra.mrb[0].mxu0 %v241
        %v676 = vpop.f32.mrb[0].mxu0
        %v677 = vadd.f32 %v542, %v676
        %v678 = vpop.f32.mrb[0].mxu0
        %679 = vmatprep.mubr.f32.mxu0 %v249
        %680 = vmatmul.mubr.f32.gmra.mrb[0].mxu0 %v248
        %v681 = vpop.f32.mrb[0].mxu0
        %v682 = vadd.f32 %v547, %v681
        %v683 = vpop.f32.mrb[0].mxu0
        %684 = vmatprep.mubr.f32.mxu0 %v256
        %685 = vmatmul.mubr.f32.gmra.mrb[0].mxu0 %v255
        %v686 = vpop.f32.mrb[0].mxu0
        %v687 = vadd.f32 %v552, %v686
        %v688 = vpop.f32.mrb[0].mxu0
        %689 = vmatprep.mubr.f32.mxu0 %v263
        %690 = vmatmul.mubr.f32.gmra.mrb[0].mxu0 %v262
        %v691 = vpop.f32.mrb[0].mxu0
        %v692 = vadd.f32 %v557, %v691
        %v693 = vpop.f32.mrb[0].mxu0
        %694 = vmatprep.mubr.f32.mxu0 %v270
        %695 = vmatmul.mubr.f32.gmra.mrb[0].mxu0 %v269
        %v696 = vpop.f32.mrb[0].mxu0
        %v697 = vadd.f32 %v562, %v696
        %v698 = vpop.f32.mrb[0].mxu0
        %699 = vmatprep.mubr.f32.mxu0 %v277
        %700 = vmatmul.mubr.f32.gmra.mrb[0].mxu0 %v276
        %v701 = vpop.f32.mrb[0].mxu0
        %v702 = vadd.f32 %v567, %v701
        %v703 = vpop.f32.mrb[0].mxu0
        %704 = vmatprep.mubr.f32.mxu0 %v284
        %705 = vmatmul.mubr.f32.gmra.mrb[0].mxu0 %v283
        %v706 = vpop.f32.mrb[0].mxu0
        %v707 = vadd.f32 %v572, %v706
        %v708 = vpop.f32.mrb[0].mxu0
        %709 = vmatprep.mubr.f32.mxu0 %v291
        %710 = vmatmul.mubr.f32.gmra.mrb[0].mxu0 %v290
        %v711 = vpop.f32.mrb[0].mxu0
        %v712 = vadd.f32 %v577, %v711
        %v713 = vpop.f32.mrb[0].mxu0
        %714 = vmatprep.mubr.f32.mxu0 %v298
        %715 = vmatmul.mubr.f32.gmra.mrb[0].mxu0 %v297
        %v716 = vpop.f32.mrb[0].mxu0
        %v717 = vadd.f32 %v582, %v716
        %v718 = vpop.f32.mrb[0].mxu0
        %719 = vdwg.mxu0
        %720 = vmatprep.subr.mxu0 0.0
        %721 = vmatpush1.msra.mxu0 %v366
        %722 = vmatprep.subr.mxu0 0.0
        %723 = vmatpush1.msra.mxu0 %v367
        %724 = vmatprep.subr.mxu0 0.0
        %725 = vmatpush1.msra.mxu0 %v368
        %726 = vmatprep.subr.mxu0 0.0
        %727 = vmatpush1.msra.mxu0 %v369
        %728 = vmatprep.subr.mxu0 0.0
        %729 = vmatpush1.msra.mxu0 %v370
        %730 = vmatprep.subr.mxu0 0.0
        %731 = vmatpush1.msra.mxu0 %v371
        %732 = vmatprep.subr.mxu0 0.0
        %733 = vmatpush1.msra.mxu0 %v372
        %734 = vmatprep.subr.mxu0 0.0
        %735 = vmatpush1.msra.mxu0 %v373
        %736 = vmatprep.subr.mxu0 0.0
        %737 = vmatpush1.msra.mxu0 %v374
        %738 = vmatprep.subr.mxu0 0.0
        %739 = vmatpush1.msra.mxu0 %v375
        %740 = vmatprep.subr.mxu0 0.0
        %741 = vmatpush1.msra.mxu0 %v376
        %742 = vmatprep.subr.mxu0 0.0
        %743 = vmatpush1.msra.mxu0 %v377
        %744 = vmatprep.subr.mxu0 0.0
        %745 = vmatpush1.msra.mxu0 %v378
        %746 = vmatprep.subr.mxu0 0.0
        %747 = vmatpush1.msra.mxu0 %v379
        %748 = vmatprep.subr.mxu0 0.0
        %749 = vmatpush1.msra.mxu0 %v380
        %750 = vmatprep.subr.mxu0 0.0
        %751 = vmatpush1.msra.mxu0 %v381
        %752 = vmatprep.subr.mxu0 0.0
        %753 = vmatpush1.msra.mxu0 %v382
        %754 = vmatprep.subr.mxu0 0.0
        %755 = vmatpush1.msra.mxu0 %v383
        %756 = vmatprep.subr.mxu0 0.0
        %757 = vmatpush1.msra.mxu0 %v384
        %758 = vmatprep.subr.mxu0 0.0
        %759 = vmatpush1.msra.mxu0 %v385
        %760 = vmatprep.subr.mxu0 0.0
        %761 = vmatpush1.msra.mxu0 %v386
        %762 = vmatprep.subr.mxu0 0.0
        %763 = vmatpush1.msra.mxu0 %v387
        %764 = vmatprep.subr.mxu0 0.0
        %765 = vmatpush1.msra.mxu0 %v388
        %766 = vmatprep.subr.mxu0 0.0
        %767 = vmatpush1.msra.mxu0 %v389
        %768 = vmatprep.subr.mxu0 0.0
        %769 = vmatpush1.msra.mxu0 %v390
        %770 = vmatprep.subr.mxu0 0.0
        %771 = vmatpush1.msra.mxu0 %v391
        %772 = vmatprep.subr.mxu0 0.0
        %773 = vmatpush1.msra.mxu0 %v392
        %774 = vmatprep.subr.mxu0 0.0
        %775 = vmatpush1.msra.mxu0 %v393
        %776 = vmatprep.subr.mxu0 0.0
        %777 = vmatpush1.msra.mxu0 %v394
        %778 = vmatprep.subr.mxu0 0.0
        %779 = vmatpush1.msra.mxu0 %v395
        %780 = vmatprep.subr.mxu0 0.0
        %781 = vmatpush1.msra.mxu0 %v396
        %782 = vmatprep.subr.mxu0 0.0
        %783 = vmatpush1.msra.mxu0 %v397
        %784 = vmatprep.mubr.f32.mxu0 %v209
        %785 = vmatmul.mubr.f32.gmra.mrb[0].mxu0 %v208
        %v786 = vpop.f32.mrb[0].mxu0
        %v787 = vadd.f32 %v652, %v786
        %v788 = vpop.f32.mrb[0].mxu0
        %789 = vmatprep.mubr.f32.mxu0 %v216
        %790 = vmatmul.mubr.f32.gmra.mrb[0].mxu0 %v215
        %v791 = vpop.f32.mrb[0].mxu0
        %v792 = vadd.f32 %v657, %v791
        %v793 = vpop.f32.mrb[0].mxu0
        %794 = vmatprep.mubr.f32.mxu0 %v223
        %795 = vmatmul.mubr.f32.gmra.mrb[0].mxu0 %v222
        %v796 = vpop.f32.mrb[0].mxu0
        %v797 = vadd.f32 %v662, %v796
        %v798 = vpop.f32.mrb[0].mxu0
        %799 = vmatprep.mubr.f32.mxu0 %v230
        %800 = vmatmul.mubr.f32.gmra.mrb[0].mxu0 %v229
        %v801 = vpop.f32.mrb[0].mxu0
        %v802 = vadd.f32 %v667, %v801
        %v803 = vpop.f32.mrb[0].mxu0
        %804 = vmatprep.mubr.f32.mxu0 %v237
        %805 = vmatmul.mubr.f32.gmra.mrb[0].mxu0 %v236
        %v806 = vpop.f32.mrb[0].mxu0
        %v807 = vadd.f32 %v672, %v806
        %v808 = vpop.f32.mrb[0].mxu0
        %809 = vmatprep.mubr.f32.mxu0 %v244
        %810 = vmatmul.mubr.f32.gmra.mrb[0].mxu0 %v243
        %v811 = vpop.f32.mrb[0].mxu0
        %v812 = vadd.f32 %v677, %v811
        %v813 = vpop.f32.mrb[0].mxu0
        %814 = vmatprep.mubr.f32.mxu0 %v251
        %815 = vmatmul.mubr.f32.gmra.mrb[0].mxu0 %v250
        %v816 = vpop.f32.mrb[0].mxu0
        %v817 = vadd.f32 %v682, %v816
        %v818 = vpop.f32.mrb[0].mxu0
        %819 = vmatprep.mubr.f32.mxu0 %v258
        %820 = vmatmul.mubr.f32.gmra.mrb[0].mxu0 %v257
        %v821 = vpop.f32.mrb[0].mxu0
        %v822 = vadd.f32 %v687, %v821
        %v823 = vpop.f32.mrb[0].mxu0
        %824 = vmatprep.mubr.f32.mxu0 %v265
        %825 = vmatmul.mubr.f32.gmra.mrb[0].mxu0 %v264
        %v826 = vpop.f32.mrb[0].mxu0
        %v827 = vadd.f32 %v692, %v826
        %v828 = vpop.f32.mrb[0].mxu0
        %829 = vmatprep.mubr.f32.mxu0 %v272
        %830 = vmatmul.mubr.f32.gmra.mrb[0].mxu0 %v271
        %v831 = vpop.f32.mrb[0].mxu0
        %v832 = vadd.f32 %v697, %v831
        %v833 = vpop.f32.mrb[0].mxu0
        %834 = vmatprep.mubr.f32.mxu0 %v279
        %835 = vmatmul.mubr.f32.gmra.mrb[0].mxu0 %v278
        %v836 = vpop.f32.mrb[0].mxu0
        %v837 = vadd.f32 %v702, %v836
        %v838 = vpop.f32.mrb[0].mxu0
        %839 = vmatprep.mubr.f32.mxu0 %v286
        %840 = vmatmul.mubr.f32.gmra.mrb[0].mxu0 %v285
        %v841 = vpop.f32.mrb[0].mxu0
        %v842 = vadd.f32 %v707, %v841
        %v843 = vpop.f32.mrb[0].mxu0
        %844 = vmatprep.mubr.f32.mxu0 %v293
        %845 = vmatmul.mubr.f32.gmra.mrb[0].mxu0 %v292
        %v846 = vpop.f32.mrb[0].mxu0
        %v847 = vadd.f32 %v712, %v846
        %v848 = vpop.f32.mrb[0].mxu0
        %849 = vmatprep.mubr.f32.mxu0 %v300
        %850 = vmatmul.mubr.f32.gmra.mrb[0].mxu0 %v299
        %v851 = vpop.f32.mrb[0].mxu0
        %v852 = vadd.f32 %v717, %v851
        %v853 = vpop.f32.mrb[0].mxu0
        %854 = vdwg.mxu0
        %855 = vmatprep.subr.mxu0 0.0
        %856 = vmatpush1.msra.mxu0 %v398
        %857 = vmatprep.subr.mxu0 0.0
        %858 = vmatpush1.msra.mxu0 %v399
        %859 = vmatprep.subr.mxu0 0.0
        %860 = vmatpush1.msra.mxu0 0.0
        %861 = vmatprep.subr.mxu0 0.0
        %862 = vmatpush1.msra.mxu0 0.0
        %863 = vmatprep.subr.mxu0 0.0
        %864 = vmatpush1.msra.mxu0 0.0
        %865 = vmatprep.subr.mxu0 0.0
        %866 = vmatpush1.msra.mxu0 0.0
        %867 = vmatprep.subr.mxu0 0.0
        %868 = vmatpush1.msra.mxu0 0.0
        %869 = vmatprep.subr.mxu0 0.0
        %870 = vmatpush1.msra.mxu0 0.0
        %871 = vmatprep.subr.mxu0 0.0
        %872 = vmatpush1.msra.mxu0 0.0
        %873 = vmatprep.subr.mxu0 0.0
        %874 = vmatpush1.msra.mxu0 0.0
        %875 = vmatprep.subr.mxu0 0.0
        %876 = vmatpush1.msra.mxu0 0.0
        %877 = vmatprep.subr.mxu0 0.0
        %878 = vmatpush1.msra.mxu0 0.0
        %879 = vmatprep.subr.mxu0 0.0
        %880 = vmatpush1.msra.mxu0 0.0
        %881 = vmatprep.subr.mxu0 0.0
        %882 = vmatpush1.msra.mxu0 0.0
        %883 = vmatprep.subr.mxu0 0.0
        %884 = vmatpush1.msra.mxu0 0.0
        %885 = vmatprep.subr.mxu0 0.0
        %886 = vmatpush1.msra.mxu0 0.0
        %887 = vmatprep.subr.mxu0 0.0
        %888 = vmatpush1.msra.mxu0 0.0
        %889 = vmatprep.subr.mxu0 0.0
        %890 = vmatpush1.msra.mxu0 0.0
        %891 = vmatprep.subr.mxu0 0.0
        %892 = vmatpush1.msra.mxu0 0.0
        %893 = vmatprep.subr.mxu0 0.0
        %894 = vmatpush1.msra.mxu0 0.0
        %895 = vmatprep.subr.mxu0 0.0
        %896 = vmatpush1.msra.mxu0 0.0
        %897 = vmatprep.subr.mxu0 0.0
        %898 = vmatpush1.msra.mxu0 0.0
        %899 = vmatprep.subr.mxu0 0.0
        %900 = vmatpush1.msra.mxu0 0.0
        %901 = vmatprep.subr.mxu0 0.0
        %902 = vmatpush1.msra.mxu0 0.0
        %903 = vmatprep.subr.mxu0 0.0
        %904 = vmatpush1.msra.mxu0 0.0
        %905 = vmatprep.subr.mxu0 0.0
        %906 = vmatpush1.msra.mxu0 0.0
        %907 = vmatprep.subr.mxu0 0.0
        %908 = vmatpush1.msra.mxu0 0.0
        %909 = vmatprep.subr.mxu0 0.0
        %910 = vmatpush1.msra.mxu0 0.0
        %911 = vmatprep.subr.mxu0 0.0
        %912 = vmatpush1.msra.mxu0 0.0
        %913 = vmatprep.subr.mxu0 0.0
        %914 = vmatpush1.msra.mxu0 0.0
        %915 = vmatprep.subr.mxu0 0.0
        %916 = vmatpush1.msra.mxu0 0.0
        %917 = vmatprep.subr.mxu0 0.0
        %918 = vmatpush1.msra.mxu0 0.0
        %919 = vmatprep.mubr.f32.mxu0 0.0
        %920 = vmatmul.mubr.f32.gmra.mrb[0].mxu0 %v409
        %v921 = vpop.f32.mrb[0].mxu0
        %v922 = vadd.f32 %v787, %v921
        %v923 = vpop.f32.mrb[0].mxu0
        %924 = vmatprep.mubr.f32.mxu0 0.0
        %925 = vmatmul.mubr.f32.gmra.mrb[0].mxu0 %v412
        %v926 = vpop.f32.mrb[0].mxu0
        %v927 = vadd.f32 %v792, %v926
        %v928 = vpop.f32.mrb[0].mxu0
        %929 = vmatprep.mubr.f32.mxu0 0.0
        %930 = vmatmul.mubr.f32.gmra.mrb[0].mxu0 %v415
        %v931 = vpop.f32.mrb[0].mxu0
        %v932 = vadd.f32 %v797, %v931
        %v933 = vpop.f32.mrb[0].mxu0
        %934 = vmatprep.mubr.f32.mxu0 0.0
        %935 = vmatmul.mubr.f32.gmra.mrb[0].mxu0 %v418
        %v936 = vpop.f32.mrb[0].mxu0
        %v937 = vadd.f32 %v802, %v936
        %v938 = vpop.f32.mrb[0].mxu0
        %939 = vmatprep.mubr.f32.mxu0 0.0
        %940 = vmatmul.mubr.f32.gmra.mrb[0].mxu0 %v421
        %v941 = vpop.f32.mrb[0].mxu0
        %v942 = vadd.f32 %v807, %v941
        %v943 = vpop.f32.mrb[0].mxu0
        %944 = vmatprep.mubr.f32.mxu0 0.0
        %945 = vmatmul.mubr.f32.gmra.mrb[0].mxu0 %v424
        %v946 = vpop.f32.mrb[0].mxu0
        %v947 = vadd.f32 %v812, %v946
        %v948 = vpop.f32.mrb[0].mxu0
        %949 = vmatprep.mubr.f32.mxu0 0.0
        %950 = vmatmul.mubr.f32.gmra.mrb[0].mxu0 %v427
        %v951 = vpop.f32.mrb[0].mxu0
        %v952 = vadd.f32 %v817, %v951
        %v953 = vpop.f32.mrb[0].mxu0
        %954 = vmatprep.mubr.f32.mxu0 0.0
        %955 = vmatmul.mubr.f32.gmra.mrb[0].mxu0 %v430
        %v956 = vpop.f32.mrb[0].mxu0
        %v957 = vadd.f32 %v822, %v956
        %v958 = vpop.f32.mrb[0].mxu0
        %959 = vmatprep.mubr.f32.mxu0 0.0
        %960 = vmatmul.mubr.f32.gmra.mrb[0].mxu0 %v433
        %v961 = vpop.f32.mrb[0].mxu0
        %v962 = vadd.f32 %v827, %v961
        %v963 = vpop.f32.mrb[0].mxu0
        %964 = vmatprep.mubr.f32.mxu0 0.0
        %965 = vmatmul.mubr.f32.gmra.mrb[0].mxu0 %v436
        %v966 = vpop.f32.mrb[0].mxu0
        %v967 = vadd.f32 %v832, %v966
        %v968 = vpop.f32.mrb[0].mxu0
        %969 = vmatprep.mubr.f32.mxu0 0.0
        %970 = vmatmul.mubr.f32.gmra.mrb[0].mxu0 %v439
        %v971 = vpop.f32.mrb[0].mxu0
        %v972 = vadd.f32 %v837, %v971
        %v973 = vpop.f32.mrb[0].mxu0
        %974 = vmatprep.mubr.f32.mxu0 0.0
        %975 = vmatmul.mubr.f32.gmra.mrb[0].mxu0 %v442
        %v976 = vpop.f32.mrb[0].mxu0
        %v977 = vadd.f32 %v842, %v976
        %v978 = vpop.f32.mrb[0].mxu0
        %979 = vmatprep.mubr.f32.mxu0 0.0
        %980 = vmatmul.mubr.f32.gmra.mrb[0].mxu0 %v445
        %v981 = vpop.f32.mrb[0].mxu0
        %v982 = vadd.f32 %v847, %v981
        %v983 = vpop.f32.mrb[0].mxu0
        %984 = vmatprep.mubr.f32.mxu0 0.0
        %985 = vmatmul.mubr.f32.gmra.mrb[0].mxu0 %v448
        %v986 = vpop.f32.mrb[0].mxu0
        %v987 = vadd.f32 %v852, %v986
        %v988 = vpop.f32.mrb[0].mxu0
        %989 = vdwg.mxu0
        %vm990 = vcmask 80896
        %991 = vst.msk [vmem:[%s192] sm:$0xff] %vm990, %v922
        %992 = vst.msk [vmem:[%s192 + $0x8] sm:$0xff] %vm990, %v927
        %993 = vst.msk [vmem:[%s192 + $0x10] sm:$0xff] %vm990, %v932
        %994 = vst.msk [vmem:[%s192 + $0x18] sm:$0xff] %vm990, %v937
        %995 = vst.msk [vmem:[%s192 + $0x20] sm:$0xff] %vm990, %v942
        %996 = vst.msk [vmem:[%s192 + $0x28] sm:$0xff] %vm990, %v947
        %997 = vst.msk [vmem:[%s192 + $0x30] sm:$0xff] %vm990, %v952
        %998 = vst.msk [vmem:[%s192 + $0x38] sm:$0xff] %vm990, %v957
        %999 = vst.msk [vmem:[%s192 + $0x40] sm:$0xff] %vm990, %v962
        %1000 = vst.msk [vmem:[%s192 + $0x48] sm:$0xff] %vm990, %v967
        %1001 = vst.msk [vmem:[%s192 + $0x50] sm:$0xff] %vm990, %v972
        %1002 = vst.msk [vmem:[%s192 + $0x58] sm:$0xff] %vm990, %v977
        %1003 = vst.msk [vmem:[%s192 + $0x60] sm:$0xff] %vm990, %v982
        %1004 = vst.msk [vmem:[%s192 + $0x68] sm:$0xff] %vm990, %v987
        %s1005 = sand.u32 %s93, 1
        %s1006 = sand.u32 %s93, 1
        %s1007 = smul.addr %s1006, 112
        %s1008 = scalar_lea.vmem [#allocation4], %s1007
        // Predicated region
        $region37: #{mnist_logistic_forward.1} parent=31 // pred_check
          %p1009 = pneg %p103
        $region38: #{mnist_logistic_forward.1} parent=31 // pred_check_branch
          %1011 = sbr.rel (%p1009) target = $region40
        $region39: #{mnist_logistic_forward.1} parent=31 // pred_region
          %s1012 = smul.u32 14, %s17
          %s1013 = ssub.s32 25, %s1012
          %p1014 = scmp.lt.s32.totalorder %s1013, 14
          %s1015 = scalar_select %p1014, %s1013, 14
          %s1016 = smul.u32 128, %s1015
          %p1017 = scmp.ne.s32.totalorder 0, %s1016
          %s1018 = smul.addr %s1012, 8
          %s1019 = scalar_lea.vmem %s3, %s1018
          // Predicated region
          $region41: #{mnist_logistic_forward.1} parent=39 // pred_check
            %p1020 = pneg %p1017
          $region42: #{mnist_logistic_forward.1} parent=39 // pred_check_branch
            %1022 = sbr.rel (%p1020) target = $region44
          $region43: #{mnist_logistic_forward.1} parent=39 // pred_region
            // Predicated region
            $region45: #{mnist_logistic_forward.1} parent=43 // pred_check
              _
            $region46: #{mnist_logistic_forward.1} parent=43 // pred_check_branch
              %1024 = sbr.rel (0) target = $region48
            $region47: #{mnist_logistic_forward.1} parent=43 // pred_region
              // Predicated region
              $region67: #{mnist_logistic_forward.1} parent=47 // pred_check
                _
              $region68: #{mnist_logistic_forward.1} parent=47 // pred_check_branch
                %1100 = sbr.rel (0) target = $region70
              $region69: #{mnist_logistic_forward.1} parent=47 // pred_region
                %s1101 = sdiv.u32.pop %s1015, 14
                %s1102 = srem.u32.pop %s1015, 14
                // While loop
                $region71: #{mnist_logistic_forward.1} parent=69 // loop_pre_header
                  _
                $region72: #{mnist_logistic_forward.1} parent=69 // loop_header
                  %s1104 = sphi 0, %s1106
                  %p1105 = scmp.ge.s32.totalorder %s1104, %s1101
                  %s1109 = sphi 0, %s1142
                  %s1110 = sphi %s1008, %s1145
                  %s1111 = sphi %s1019, %s1146
                $region73: #{mnist_logistic_forward.1} parent=69 // loop_header_branch
                  %1108 = sbr.rel (%p1105) target = $region77
                $region74: #{mnist_logistic_forward.1} parent=69 // loop_body
                  %v1112 = vld [vmem:[%s1110] sm:$0xff]
                  %1113 = vst [vmem:[%s1111] sm:$0xff] %v1112
                  %v1114 = vld [vmem:[%s1110 + $0x8] sm:$0xff]
                  %1115 = vst [vmem:[%s1111 + $0x8] sm:$0xff] %v1114
                  %v1116 = vld [vmem:[%s1110 + $0x10] sm:$0xff]
                  %1117 = vst [vmem:[%s1111 + $0x10] sm:$0xff] %v1116
                  %v1118 = vld [vmem:[%s1110 + $0x18] sm:$0xff]
                  %1119 = vst [vmem:[%s1111 + $0x18] sm:$0xff] %v1118
                  %v1120 = vld [vmem:[%s1110 + $0x20] sm:$0xff]
                  %1121 = vst [vmem:[%s1111 + $0x20] sm:$0xff] %v1120
                  %v1122 = vld [vmem:[%s1110 + $0x28] sm:$0xff]
                  %1123 = vst [vmem:[%s1111 + $0x28] sm:$0xff] %v1122
                  %v1124 = vld [vmem:[%s1110 + $0x30] sm:$0xff]
                  %1125 = vst [vmem:[%s1111 + $0x30] sm:$0xff] %v1124
                  %v1126 = vld [vmem:[%s1110 + $0x38] sm:$0xff]
                  %1127 = vst [vmem:[%s1111 + $0x38] sm:$0xff] %v1126
                  %v1128 = vld [vmem:[%s1110 + $0x40] sm:$0xff]
                  %1129 = vst [vmem:[%s1111 + $0x40] sm:$0xff] %v1128
                  %v1130 = vld [vmem:[%s1110 + $0x48] sm:$0xff]
                  %1131 = vst [vmem:[%s1111 + $0x48] sm:$0xff] %v1130
                  %v1132 = vld [vmem:[%s1110 + $0x50] sm:$0xff]
                  %1133 = vst [vmem:[%s1111 + $0x50] sm:$0xff] %v1132
                  %v1134 = vld [vmem:[%s1110 + $0x58] sm:$0xff]
                  %1135 = vst [vmem:[%s1111 + $0x58] sm:$0xff] %v1134
                  %v1136 = vld [vmem:[%s1110 + $0x60] sm:$0xff]
                  %1137 = vst [vmem:[%s1111 + $0x60] sm:$0xff] %v1136
                  %v1138 = vld [vmem:[%s1110 + $0x68] sm:$0xff]
                  %1139 = vst [vmem:[%s1111 + $0x68] sm:$0xff] %v1138
                  %s1140 = sadd.s32 1, %s1109
                  %p1141 = scmp.ge.s32.totalorder %s1140, %s1101
                  %s1142 = scalar_select %p1141, 0, %s1140
                  %s1143 = smul.u32 %s1142, 112
                  %s1144 = smul.u32 %s1142, 112
                  %s1145 = scalar_lea.vmem %s1008, %s1143 [#allocation4]
                  %s1146 = scalar_lea.vmem %s1019, %s1144
                $region75: #{mnist_logistic_forward.1} parent=69 // loop_footer
                  %s1106 = sadd.s32 %s1104, 1
                $region76: #{mnist_logistic_forward.1} parent=69 // loop_footer_branch
                  %1103 = sbr.rel target = $region72
                $region77: #{mnist_logistic_forward.1} parent=69 // loop_exit
                  _
                %s1147 = sdiv.u32.pop %s1015, 14
                %s1148 = srem.u32.pop %s1015, 14
                %s1149 = smul.u32 %s1147, 14
                %s1150 = smul.u32 8, %s1149
                %s1151 = scalar_lea.vmem %s1008, %s1150 [#allocation4]
                %s1152 = smul.u32 8, %s1149
                %s1153 = scalar_lea.vmem %s1019, %s1152
                // While loop
                $region78: #{mnist_logistic_forward.1} parent=69 // loop_pre_header
                  _
                $region79: #{mnist_logistic_forward.1} parent=69 // loop_header
                  %s1155 = sphi 0, %s1157
                  %p1156 = scmp.ge.s32.totalorder %s1155, %s1148
                  %s1160 = sphi 0, %s1167
                  %s1161 = sphi %s1151, %s1170
                  %s1162 = sphi %s1153, %s1171
                $region80: #{mnist_logistic_forward.1} parent=69 // loop_header_branch
                  %1159 = sbr.rel (%p1156) target = $region84
                $region81: #{mnist_logistic_forward.1} parent=69 // loop_body
                  %v1163 = vld [vmem:[%s1161] sm:$0xff]
                  %1164 = vst [vmem:[%s1162] sm:$0xff] %v1163
                  %s1165 = sadd.s32 1, %s1160
                  %p1166 = scmp.ge.s32.totalorder %s1165, %s1148
                  %s1167 = scalar_select %p1166, 0, %s1165
                  %s1168 = smul.u32 %s1167, 8
                  %s1169 = smul.u32 %s1167, 8
                  %s1170 = scalar_lea.vmem %s1151, %s1168 [#allocation4]
                  %s1171 = scalar_lea.vmem %s1153, %s1169
                $region82: #{mnist_logistic_forward.1} parent=69 // loop_footer
                  %s1157 = sadd.s32 %s1155, 1
                $region83: #{mnist_logistic_forward.1} parent=69 // loop_footer_branch
                  %1154 = sbr.rel target = $region79
                $region84: #{mnist_logistic_forward.1} parent=69 // loop_exit
                  _
              $region70: #{mnist_logistic_forward.1} parent=47 // pred_fallthru
                _
              // Predicated region
              $region85: #{mnist_logistic_forward.1} parent=47 // pred_check
                _
              $region86: #{mnist_logistic_forward.1} parent=47 // pred_check_branch
                %1173 = sbr.rel target = $region88
              $region87: #{mnist_logistic_forward.1} parent=47 // pred_region
                _
              $region88: #{mnist_logistic_forward.1} parent=47 // pred_fallthru
                _
            $region48: #{mnist_logistic_forward.1} parent=43 // pred_fallthru
              _
            // Predicated region
            $region49: #{mnist_logistic_forward.1} parent=43 // pred_check
              _
            $region50: #{mnist_logistic_forward.1} parent=43 // pred_check_branch
              %1026 = sbr.rel target = $region52
            $region51: #{mnist_logistic_forward.1} parent=43 // pred_region
              %s1028 = sdiv.u32.pop %s1015, 14
              %s1029 = srem.u32.pop %s1015, 14
              // While loop
              $region53: #{mnist_logistic_forward.1} parent=51 // loop_pre_header
                _
              $region54: #{mnist_logistic_forward.1} parent=51 // loop_header
                %s1031 = sphi 0, %s1033
                %p1032 = scmp.ge.s32.totalorder %s1031, %s1028
                %s1036 = sphi 0, %s1069
                %s1037 = sphi %s1008, %s1072
                %s1038 = sphi %s1019, %s1073
              $region55: #{mnist_logistic_forward.1} parent=51 // loop_header_branch
                %1035 = sbr.rel (%p1032) target = $region59
              $region56: #{mnist_logistic_forward.1} parent=51 // loop_body
                %v1039 = vld [vmem:[%s1037] sm:$0xff]
                %1040 = vst [vmem:[%s1038] sm:$0xff] %v1039
                %v1041 = vld [vmem:[%s1037 + $0x8] sm:$0xff]
                %1042 = vst [vmem:[%s1038 + $0x8] sm:$0xff] %v1041
                %v1043 = vld [vmem:[%s1037 + $0x10] sm:$0xff]
                %1044 = vst [vmem:[%s1038 + $0x10] sm:$0xff] %v1043
                %v1045 = vld [vmem:[%s1037 + $0x18] sm:$0xff]
                %1046 = vst [vmem:[%s1038 + $0x18] sm:$0xff] %v1045
                %v1047 = vld [vmem:[%s1037 + $0x20] sm:$0xff]
                %1048 = vst [vmem:[%s1038 + $0x20] sm:$0xff] %v1047
                %v1049 = vld [vmem:[%s1037 + $0x28] sm:$0xff]
                %1050 = vst [vmem:[%s1038 + $0x28] sm:$0xff] %v1049
                %v1051 = vld [vmem:[%s1037 + $0x30] sm:$0xff]
                %1052 = vst [vmem:[%s1038 + $0x30] sm:$0xff] %v1051
                %v1053 = vld [vmem:[%s1037 + $0x38] sm:$0xff]
                %1054 = vst [vmem:[%s1038 + $0x38] sm:$0xff] %v1053
                %v1055 = vld [vmem:[%s1037 + $0x40] sm:$0xff]
                %1056 = vst [vmem:[%s1038 + $0x40] sm:$0xff] %v1055
                %v1057 = vld [vmem:[%s1037 + $0x48] sm:$0xff]
                %1058 = vst [vmem:[%s1038 + $0x48] sm:$0xff] %v1057
                %v1059 = vld [vmem:[%s1037 + $0x50] sm:$0xff]
                %1060 = vst [vmem:[%s1038 + $0x50] sm:$0xff] %v1059
                %v1061 = vld [vmem:[%s1037 + $0x58] sm:$0xff]
                %1062 = vst [vmem:[%s1038 + $0x58] sm:$0xff] %v1061
                %v1063 = vld [vmem:[%s1037 + $0x60] sm:$0xff]
                %1064 = vst [vmem:[%s1038 + $0x60] sm:$0xff] %v1063
                %v1065 = vld [vmem:[%s1037 + $0x68] sm:$0xff]
                %1066 = vst [vmem:[%s1038 + $0x68] sm:$0xff] %v1065
                %s1067 = sadd.s32 1, %s1036
                %p1068 = scmp.ge.s32.totalorder %s1067, %s1028
                %s1069 = scalar_select %p1068, 0, %s1067
                %s1070 = smul.u32 %s1069, 112
                %s1071 = smul.u32 %s1069, 112
                %s1072 = scalar_lea.vmem %s1008, %s1070 [#allocation4]
                %s1073 = scalar_lea.vmem %s1019, %s1071
              $region57: #{mnist_logistic_forward.1} parent=51 // loop_footer
                %s1033 = sadd.s32 %s1031, 1
              $region58: #{mnist_logistic_forward.1} parent=51 // loop_footer_branch
                %1030 = sbr.rel target = $region54
              $region59: #{mnist_logistic_forward.1} parent=51 // loop_exit
                _
              %s1074 = sdiv.u32.pop %s1015, 14
              %s1075 = srem.u32.pop %s1015, 14
              %s1076 = smul.u32 %s1074, 14
              %s1077 = smul.u32 8, %s1076
              %s1078 = scalar_lea.vmem %s1008, %s1077 [#allocation4]
              %s1079 = smul.u32 8, %s1076
              %s1080 = scalar_lea.vmem %s1019, %s1079
              // While loop
              $region60: #{mnist_logistic_forward.1} parent=51 // loop_pre_header
                _
              $region61: #{mnist_logistic_forward.1} parent=51 // loop_header
                %s1082 = sphi 0, %s1084
                %p1083 = scmp.ge.s32.totalorder %s1082, %s1075
                %s1087 = sphi 0, %s1094
                %s1088 = sphi %s1078, %s1097
                %s1089 = sphi %s1080, %s1098
              $region62: #{mnist_logistic_forward.1} parent=51 // loop_header_branch
                %1086 = sbr.rel (%p1083) target = $region66
              $region63: #{mnist_logistic_forward.1} parent=51 // loop_body
                %v1090 = vld [vmem:[%s1088] sm:$0xff]
                %1091 = vst [vmem:[%s1089] sm:$0xff] %v1090
                %s1092 = sadd.s32 1, %s1087
                %p1093 = scmp.ge.s32.totalorder %s1092, %s1075
                %s1094 = scalar_select %p1093, 0, %s1092
                %s1095 = smul.u32 %s1094, 8
                %s1096 = smul.u32 %s1094, 8
                %s1097 = scalar_lea.vmem %s1078, %s1095 [#allocation4]
                %s1098 = scalar_lea.vmem %s1080, %s1096
              $region64: #{mnist_logistic_forward.1} parent=51 // loop_footer
                %s1084 = sadd.s32 %s1082, 1
              $region65: #{mnist_logistic_forward.1} parent=51 // loop_footer_branch
                %1081 = sbr.rel target = $region61
              $region66: #{mnist_logistic_forward.1} parent=51 // loop_exit
                _
            $region52: #{mnist_logistic_forward.1} parent=43 // pred_fallthru
              _
          $region44: #{mnist_logistic_forward.1} parent=39 // pred_fallthru
            _
          %1174 = vnop
        $region40: #{mnist_logistic_forward.1} parent=31 // pred_fallthru
          _
      $region32: #{mnist_logistic_forward.1} parent=5 // pred_fallthru
        _
      %p1175 = scmp.le.s32.totalorder 2, %s12
      // Predicated region
      $region89: #{mnist_logistic_forward.1} parent=5 // pred_check
        %p1176 = pneg %p1175
      $region90: #{mnist_logistic_forward.1} parent=5 // pred_check_branch
        %1178 = sbr.rel (%p1176) target = $region92
      $region91: #{mnist_logistic_forward.1} parent=5 // pred_region
        %s1179 = ssub.s32 %s12, 2
        // Predicated region
        $region93: #{mnist_logistic_forward.1} parent=91 // pred_check
          %p1180 = pneg %p109
        $region94: #{mnist_logistic_forward.1} parent=91 // pred_check_branch
          %1182 = sbr.rel (%p1180) target = $region96
        $region95: #{mnist_logistic_forward.1} parent=91 // pred_region
          %s1183 = sand.u32 %s94, 1
          %s1184 = sand.u32 %s94, 1
          %s1185 = smul.addr %s1184, 112
          %s1186 = scalar_lea.vmem [#allocation4], %s1185
        $region96: #{mnist_logistic_forward.1} parent=91 // pred_fallthru
          _
      $region92: #{mnist_logistic_forward.1} parent=5 // pred_fallthru
        _
    $region6: #{mnist_logistic_forward.1} parent=1 // loop_footer
      %s16 = sadd.s32 1, %s12
    $region7: #{mnist_logistic_forward.1} parent=1 // loop_footer_branch
      %11 = sbr.rel target = $region3
    $region8: #{mnist_logistic_forward.1} parent=1 // loop_exit
      _
    %1187 = vsyncpa [#allocation3], 1
    %s1188 = scalar_lea.sflag [#allocation3], 1
    %1189 = vsyncpa %s1188, 1

</llo_original>
